<compile_context>
chip_gen: v6e
topology: v6e:2x2x1
jax: 0.10.0
libtpu: 0.0.40
codegen_flags: <defaults>
</compile_context>

<pallas_src>
import math

import jax
import jax.numpy as jnp
from jax.experimental import pallas as pl
from jax.experimental.pallas import tpu as pltpu


# ----------------------------------------------------------------------------
# Activations (used both in the fused kernel epilogue and in the JAX glue)
# ----------------------------------------------------------------------------

def gelu(x):
    return 0.5 * x * (1.0 + jnp.tanh(math.sqrt(2.0 / math.pi) * (x + 0.044715 * x ** 3)))


def swish(x):
    return x * jax.nn.sigmoid(x)


ACT_FNS = {"relu": jax.nn.relu, "gelu": gelu, "swish": swish, "sigmoid": jax.nn.sigmoid}


# ----------------------------------------------------------------------------
# Pallas dense (Conv1D rf==1) kernel: out = act(x @ w + b)
# ----------------------------------------------------------------------------

def _cdiv(a, b):
    return -(-a // b)


def _round_up(x, m):
    return _cdiv(x, m) * m


def _pick_tile(dim, target, align):
    """Largest aligned tile <= target whose block count gives minimal padding."""
    dim_a = _round_up(max(dim, 1), align)
    if dim_a <= target:
        return dim_a
    nblocks = _cdiv(dim_a, target)
    return _round_up(_cdiv(dim_a, nblocks), align)


def _pad2d(a, rows, cols):
    pr, pc = rows - a.shape[0], cols - a.shape[1]
    if pr or pc:
        a = jnp.pad(a, ((0, pr), (0, pc)))
    return a


_VMEM_PHYS = None


def _vmem_cap_bytes():
    """Generation-aware VMEM cap (v7x: 64 MiB/TC vs 128 MiB on v5e/v6e), ~1/8 headroom."""
    global _VMEM_PHYS
    if _VMEM_PHYS is None:
        try:
            _VMEM_PHYS = int(pltpu.get_tpu_info().vmem_capacity_bytes)
        except Exception:
            _VMEM_PHYS = 64 * 1024 * 1024      # conservative: safe on every generation
    return (_VMEM_PHYS * 7) // 8


def _weight_spec(block_shape, index_map, buffers):
    """Weight BlockSpec, optionally 3-deep buffered (small-M / v5e decode shapes)."""
    if buffers > 2:
        try:
            return pl.BlockSpec(block_shape, index_map, pipeline_mode=pl.Buffered(buffers))
        except Exception:
            pass   # older JAX without pipeline_mode -> default double buffering
    return pl.BlockSpec(block_shape, index_map)


def _make_single_pass_kernel(act, has_bias):
    """Whole K reduction in one MXU dot; bias + activation + cast fused."""
    if has_bias:
        def kernel(x_ref, w_ref, b_ref, o_ref):
            y = jnp.dot(x_ref[...], w_ref[...], preferred_element_type=jnp.float32)
            y = y + b_ref[...]
            if act is not None:
                y = act(y)
            o_ref[...] = y.astype(o_ref.dtype)
    else:
        def kernel(x_ref, w_ref, o_ref):
            y = jnp.dot(x_ref[...], w_ref[...], preferred_element_type=jnp.float32)
            if act is not None:
                y = act(y)
            o_ref[...] = y.astype(o_ref.dtype)
    return kernel


def _make_kloop_kernel(act, has_bias):
    """K-tiled path: f32 VMEM accumulator (bias folded into the k==0 init),
    activation + cast fused into the last-k finalize, o_ref written once."""
    if has_bias:
        def kernel(x_ref, w_ref, b_ref, o_ref, acc_ref):
            k = pl.program_id(2)

            @pl.when(k == 0)
            def _():
                acc_ref[...] = jnp.broadcast_to(b_ref[...], acc_ref.shape)

            acc_ref[...] += jnp.dot(x_ref[...], w_ref[...],
                                    preferred_element_type=jnp.float32)

            @pl.when(k == pl.num_programs(2) - 1)
            def _():
                y = acc_ref[...]
                if act is not None:
                    y = act(y)
                o_ref[...] = y.astype(o_ref.dtype)
    else:
        def kernel(x_ref, w_ref, o_ref, acc_ref):
            k = pl.program_id(2)

            @pl.when(k == 0)
            def _():
                acc_ref[...] = jnp.zeros_like(acc_ref)

            acc_ref[...] += jnp.dot(x_ref[...], w_ref[...],
                                    preferred_element_type=jnp.float32)

            @pl.when(k == pl.num_programs(2) - 1)
            def _():
                y = acc_ref[...]
                if act is not None:
                    y = act(y)
                o_ref[...] = y.astype(o_ref.dtype)
    return kernel


def dense_pallas(x, w, b=None, *, activation=None, tm=256, tn=1024, tk=1024,
                 compute_dtype=jnp.bfloat16, min_pallas_dim=256):
    """y = act(x @ w + b).  x: (..., nx), w: (nx, nf), b: (nf,) or None."""
    nx, nf = w.shape
    size_out = x.shape[:-1] + (nf,)
    out_dtype = x.dtype if jnp.issubdtype(x.dtype, jnp.floating) else jnp.float32
    act = ACT_FNS[activation] if activation is not None else None

    x2d = x.reshape(-1, nx)
    M = x2d.shape[0]
    has_bias = b is not None

    # Small-shape fallback: at tiny nx/nf (the demo's hSize=32 projections) the
    # (8,128) padding + per-call dispatch would dominate -- let XLA fuse the dot.
    if nx < min_pallas_dim and nf < min_pallas_dim:
        y = jnp.matmul(x2d.astype(jnp.float32), w.astype(jnp.float32),
                       precision=jax.lax.Precision.HIGHEST)
        if has_bias:
            y = y + b.astype(jnp.float32)
        if act is not None:
            y = act(y)
        return y.reshape(size_out).astype(out_dtype)

    # bf16 operands feed the MXU at native rate and halve x/w DMA bytes;
    # accumulation, bias and the epilogue stay in f32.
    xc = x2d.astype(compute_dtype)
    wc = w.astype(compute_dtype)
    bias = b.astype(jnp.float32).reshape(1, nf) if has_bias else None

    # Minimal-padding, layout-aligned tiles (16 sublanes for bf16 packing, 128 lanes).
    tm = _pick_tile(M, tm, 16)
    tk = _pick_tile(nx, tk, 128)
    tn = _pick_tile(nf, tn, 128)
    gm, gk, gn = _cdiv(M, tm), _cdiv(nx, tk), _cdiv(nf, tn)
    Mp, Kp, Np = gm * tm, gk * tk, gn * tn

    # v7x has 2 TensorCores: if the whole output would be one block, split N so a
    # "parallel" grid axis has >= 2 blocks (extra step is negligible on v5e/v6e).
    if gm == 1 and gn == 1 and Np >= 512 and Np % 256 == 0:
        tn, gn = Np // 2, 2

    # Total HBM reads are gn*|x| + gm*|w| regardless of i/j grid order, so operand
    # reuse is handled by the tile picker driving gm==1 (small M) / gn==1 (small N).
    xp = _pad2d(xc, Mp, Kp)
    wp = _pad2d(wc, Kp, Np)

    # Deeper weight buffering only helps decode-style small-M multi-step grids
    # (v5e is the most weight-DMA-bound generation).
    w_bufs = 3 if (Mp <= 64 and gn * gk >= 3) else 2

    out_isize = jnp.dtype(out_dtype).itemsize
    working = (2 * tm * tk * 2 + w_bufs * tk * tn * 2
               + (2 * tn * 4 if has_bias else 0)
               + 2 * tm * tn * out_isize
               + (tm * tn * 4 if gk > 1 else 0))
    vmem_limit = int(min(_vmem_cap_bytes(), max(2 * working, 32 * 1024 * 1024)))

    operands = [xp, wp]
    if gk == 1:
        in_specs = [pl.BlockSpec((tm, tk), lambda i, j: (i, 0)),
                    _weight_spec((tk, tn), lambda i, j: (0, j), w_bufs)]
        if has_bias:
            in_specs.append(pl.BlockSpec((1, tn), lambda i, j: (0, j)))
            operands.append(_pad2d(bias, 1, Np))
        out = pl.pallas_call(
            _make_single_pass_kernel(act, has_bias),
            out_shape=jax.ShapeDtypeStruct((Mp, Np), out_dtype),
            grid_spec=pltpu.PrefetchScalarGridSpec(
                num_scalar_prefetch=0, grid=(gm, gn),
                in_specs=in_specs,
                out_specs=pl.BlockSpec((tm, tn), lambda i, j: (i, j))),
            compiler_params=pltpu.CompilerParams(
                dimension_semantics=("parallel", "parallel"),
                vmem_limit_bytes=vmem_limit),
        )(*operands)
    else:
        in_specs = [pl.BlockSpec((tm, tk), lambda i, j, k: (i, k)),
                    _weight_spec((tk, tn), lambda i, j, k: (k, j), w_bufs)]
        if has_bias:
            in_specs.append(pl.BlockSpec((1, tn), lambda i, j, k: (0, j)))
            operands.append(_pad2d(bias, 1, Np))
        out = pl.pallas_call(
            _make_kloop_kernel(act, has_bias),
            out_shape=jax.ShapeDtypeStruct((Mp, Np), out_dtype),
            grid_spec=pltpu.PrefetchScalarGridSpec(
                num_scalar_prefetch=0, grid=(gm, gn, gk),
                in_specs=in_specs,
                out_specs=pl.BlockSpec((tm, tn), lambda i, j, k: (i, j)),
                scratch_shapes=[pltpu.VMEM((tm, tn), jnp.float32)]),
            compiler_params=pltpu.CompilerParams(
                dimension_semantics=("parallel", "parallel", "arbitrary"),
                vmem_limit_bytes=vmem_limit),
        )(*operands)

    return out[:M, :nf].reshape(size_out)


def dense_ref(x, w, b=None, activation=None):
    """Pure-JAX f32 reference for the dense projection."""
    y = jnp.matmul(x.reshape(-1, w.shape[0]).astype(jnp.float32), w.astype(jnp.float32),
                   precision=jax.lax.Precision.HIGHEST)
    if b is not None:
        y = y + b.astype(jnp.float32)
    if activation is not None:
        y = ACT_FNS[activation](y)
    return y.reshape(x.shape[:-1] + (w.shape[1],)).astype(x.dtype)


# ----------------------------------------------------------------------------
# Model (forward-pass semantics of the PyTorch modules; params as dicts)
# ----------------------------------------------------------------------------

class Cfg:
    hSize = 32
    nH = 4
    nL = 1
    afn = "gelu"
    # Dropout rates (edpt/adpt/rdpt) exist in the PyTorch module; inference -> identity.
    edpt = 0.0
    adpt = 0.0
    rdpt = 0.0


def init_conv1d(key, nx, nf):
    return {"w": 0.02 * jax.random.normal(key, (nx, nf), jnp.float32),
            "b": jnp.zeros((nf,), jnp.float32)}


def init_layernorm(n):
    return {"g": jnp.ones((n,), jnp.float32), "b": jnp.zeros((n,), jnp.float32)}


def init_batchnorm(n):
    return {"g": jnp.ones((n,), jnp.float32), "b": jnp.zeros((n,), jnp.float32),
            "mean": jnp.zeros((n,), jnp.float32), "var": jnp.ones((n,), jnp.float32)}


def init_block(key, h):
    k1, k2, k3, k4 = jax.random.split(key, 4)
    return {
        "attn": {"c_attn": init_conv1d(k1, h, 3 * h), "c_proj": init_conv1d(k2, h, h)},
        "ln_1": init_layernorm(h),
        "mlp": {"c_fc": init_conv1d(k3, h, 4 * h), "c_proj": init_conv1d(k4, 4 * h, h)},
        "ln_2": init_layernorm(h),
    }


def init_transformer(key, cfg, vocab, n_ctx):
    keys = jax.random.split(key, cfg.nL + 1)
    embed = 0.02 * jax.random.normal(keys[0], (vocab, cfg.hSize), jnp.float32)
    embed = embed.at[0].set(0.0)  # padding_idx=0
    return {
        "embed": embed,
        "causal_mask": jnp.tril(jnp.ones((n_ctx, n_ctx), jnp.float32))[None, None],
        "blocks": [init_block(k, cfg.hSize) for k in keys[1:]],
    }


def init_tucker(key, d1, d2):
    return {"W": jax.random.uniform(key, (d2, d1, d1), jnp.float32, -1.0, 1.0),
            "bn0": init_batchnorm(d1), "bn1": init_batchnorm(d1)}


def init_transformer_tucker(key, cfg, n_entities, n_relations, ent_dim, rel_dim, vocab, n_ctx):
    k_t, k_te, k_tr, k_E, k_R, k_W = jax.random.split(key, 6)
    E = 0.02 * jax.random.normal(k_E, (n_entities, ent_dim), jnp.float32)
    E = E.at[0].set(0.0)
    R = 0.02 * jax.random.normal(k_R, (n_relations, rel_dim), jnp.float32)
    R = R.at[0].set(0.0)
    return {
        "transformer": init_transformer(k_t, cfg, vocab, n_ctx),
        "translationE": init_conv1d(k_te, cfg.hSize, ent_dim),
        "translationR": init_conv1d(k_tr, cfg.hSize, rel_dim),
        "E": E, "R": R,
        "tucker": init_tucker(k_W, ent_dim, rel_dim),
    }


def layer_norm(p, x, e=1e-5):
    u = jnp.mean(x, axis=-1, keepdims=True)
    s = jnp.mean((x - u) ** 2, axis=-1, keepdims=True)
    xn = (x - u) / jnp.sqrt(s + e)
    return p["g"] * xn + p["b"]


def batchnorm1d_eval(p, x, eps=1e-5):
    # TODO(synk): BatchNorm1d implemented in eval mode (running stats); training-mode batch stats not emulated.
    return (x - p["mean"]) / jnp.sqrt(p["var"] + eps) * p["g"] + p["b"]


def attention_fwd(p, x, causal_mask, n_head, dense, sequence_mask=None, scale=True):
    B, S, nx = x.shape
    hd = nx // n_head
    c = dense(x, p["c_attn"]["w"], p["c_attn"]["b"])               # (B,S,3*nx)
    q, k, v = jnp.split(c, 3, axis=2)
    q = jnp.transpose(q.reshape(B, S, n_head, hd), (0, 2, 1, 3))   # (B,H,S,hd)
    k = jnp.transpose(k.reshape(B, S, n_head, hd), (0, 2, 3, 1))   # (B,H,hd,S)
    v = jnp.transpose(v.reshape(B, S, n_head, hd), (0, 2, 1, 3))   # (B,H,S,hd)
    w = jnp.matmul(q, k, precision=jax.lax.Precision.HIGHEST)      # (B,H,S,S)
    if scale:
        w = w / math.sqrt(hd)
    bmask = causal_mask[:, :, :S, :S]
    if sequence_mask is not None:
        bmask = bmask * sequence_mask.reshape(sequence_mask.shape[0], 1, -1)
        bmask = jnp.transpose(bmask, (1, 0, 2, 3))
    w = w * bmask + (-1e9) * (1.0 - bmask)
    w = jax.nn.softmax(w, axis=-1)
    a = jnp.matmul(w, v, precision=jax.lax.Precision.HIGHEST)      # (B,H,S,hd)
    a = jnp.transpose(a, (0, 2, 1, 3)).reshape(B, S, nx)
    return dense(a, p["c_proj"]["w"], p["c_proj"]["b"])


def mlp_fwd(p, x, afn, dense):
    # Activation fused into the c_fc dense epilogue (saves one HBM round trip).
    h = dense(x, p["c_fc"]["w"], p["c_fc"]["b"], activation=afn)
    return dense(h, p["c_proj"]["w"], p["c_proj"]["b"])


def block_fwd(p, x, causal_mask, cfg, dense, sequence_mask=None):
    a = attention_fwd(p["attn"], x, causal_mask, cfg.nH, dense, sequence_mask, scale=True)
    n = layer_norm(p["ln_1"], x + a)
    m = mlp_fwd(p["mlp"], n, cfg.afn, dense)
    return layer_norm(p["ln_2"], n + m)


def transformer_fwd(p, ids, cfg, dense, sequence_mask=None):
    ids = ids.reshape(-1, ids.shape[-2], ids.shape[-1])   # (B,S,K) int ids
    e = p["embed"][ids]                                   # (B,S,K,hSize) gather
    h = jnp.sum(e, axis=2)                                # (B,S,hSize)
    for blk in p["blocks"]:
        h = block_fwd(blk, h, p["causal_mask"], cfg, dense, sequence_mask)
    return h


def tucker_fwd(p, e_emb_weight, e1, r, dense):
    d1 = e1.shape[1]
    x = batchnorm1d_eval(p["bn0"], e1)
    x = x.reshape(-1, 1, d1)
    W_mat = dense(r, p["W"].reshape(p["W"].shape[0], -1), None)    # (B, d1*d1)
    W_mat = W_mat.reshape(-1, d1, d1)
    x = jnp.matmul(x, W_mat, precision=jax.lax.Precision.HIGHEST).reshape(-1, d1)
    x = batchnorm1d_eval(p["bn1"], x)
    # Final entity scoring with the sigmoid fused into the dense epilogue.
    return dense(x, jnp.transpose(e_emb_weight), None, activation="sigmoid")


def transformer_tucker_fwd(p, cfg, e_ids, r_ids, dense, sequence_mask=None):
    # Batch the two transformer passes into one: 2x the GEMM rows, half the
    # kernel launches and half the weight HBM reads (same weights serve both).
    e3 = e_ids.reshape(-1, e_ids.shape[-2], e_ids.shape[-1])
    r3 = r_ids.reshape(-1, r_ids.shape[-2], r_ids.shape[-1])
    if e3.shape[1:] == r3.shape[1:]:
        ids = jnp.concatenate([e3, r3], axis=0)
        mask = None if sequence_mask is None else jnp.concatenate(
            [sequence_mask, sequence_mask], axis=0)
        h = transformer_fwd(p["transformer"], ids, cfg, dense, mask)[:, 0, :]
        he, hr = h[:e3.shape[0]], h[e3.shape[0]:]
    else:
        he = transformer_fwd(p["transformer"], e3, cfg, dense, sequence_mask)[:, 0, :]
        hr = transformer_fwd(p["transformer"], r3, cfg, dense, sequence_mask)[:, 0, :]
    te = dense(he, p["translationE"]["w"], p["translationE"]["b"])
    tr = dense(hr, p["translationR"]["w"], p["translationR"]["b"])
    # TODO(synk): original TuckER.forward references self.E defined on TransformerTucker; wired explicitly here.
    return tucker_fwd(p["tucker"], p["E"], te, tr, dense)


# ----------------------------------------------------------------------------
# Demo
# ----------------------------------------------------------------------------

if __name__ == "__main__":
    key = jax.random.PRNGKey(0)
    k_params, k_e, k_r, kx1, kw1, kb1, kx2, kw2 = jax.random.split(key, 8)

    # bf16-operand reference (matches the kernel's numerics: bf16 inputs, f32 accum).
    def bf16_ref(x, w, b=None, activation=None):
        y = jnp.dot(x.astype(jnp.bfloat16), w.astype(jnp.bfloat16),
                    preferred_element_type=jnp.float32)
        if b is not None:
            y = y + b
        if activation is not None:
            y = ACT_FNS[activation](y)
        return y

    # --- standalone checks of both kernel paths ---
    # Single-K-pass path (gk == 1), with bias; N split across 2 blocks (v7x 2-TC).
    xa = jax.random.normal(kx1, (64, 384), jnp.float32)
    wa = 0.02 * jax.random.normal(kw1, (384, 512), jnp.float32)
    ba = 0.1 * jax.random.normal(kb1, (512,), jnp.float32)
    ya = jax.block_until_ready(dense_pallas(xa, wa, ba))
    assert jnp.allclose(ya, bf16_ref(xa, wa, ba), atol=5e-3, rtol=5e-3)

    # K-loop path (nx=2048 > tk target -> 2 reduction steps), no bias, fused gelu.
    xb = jax.random.normal(kx2, (300, 2048), jnp.float32)
    wb = 0.02 * jax.random.normal(kw2, (2048, 768), jnp.float32)
    yb = jax.block_until_ready(dense_pallas(xb, wb, None, activation="gelu"))
    assert jnp.allclose(yb, bf16_ref(xb, wb, None, activation="gelu"),
                        atol=5e-3, rtol=5e-3)

    # --- full TransformerTucker forward at small shapes ---
    cfg = Cfg()
    vocab, n_ctx = 64, 8
    n_entities, n_relations = 20, 10
    ent_dim, rel_dim = 16, 16
    B, S, K = 2, 8, 2

    params = init_transformer_tucker(
        k_params, cfg, n_entities, n_relations, ent_dim, rel_dim, vocab, n_ctx)

    e_ids = jax.random.randint(k_e, (B, S, K), 0, vocab)
    r_ids = jax.random.randint(k_r, (B, S, K), 0, vocab)

    pred = transformer_tucker_fwd(params, cfg, e_ids, r_ids, dense_pallas)
    pred = jax.block_until_ready(pred)

    pred_ref = transformer_tucker_fwd(params, cfg, e_ids, r_ids, dense_ref)
    assert pred.shape == (B, n_entities)
    assert bool(jnp.all(jnp.isfinite(pred)))
    assert jnp.allclose(pred, pred_ref, atol=2e-3, rtol=2e-3)

    print("KERNEL_OK")
</pallas_src>

<mosaic_0001>
module attributes {stable_mosaic.version = 11 : i64} {
  func.func @kernel(%arg0: i32, %arg1: i32, %arg2: memref<64x384xbf16, #tpu.memory_space<vmem>>, %arg3: memref<384x256xbf16, #tpu.memory_space<vmem>>, %arg4: memref<1x256xf32, #tpu.memory_space<vmem>>, %arg5: memref<64x256xf32, #tpu.memory_space<vmem>>) attributes {dimension_semantics = [#tpu.dimension_semantics<parallel>, #tpu.dimension_semantics<parallel>], iteration_bounds = array<i64: 1, 2>, scalar_prefetch = 0 : i64, scratch_operands = 0 : i64, tpu.core_type = #tpu.core_type<tc>, window_params = [{transform_indices = @transform_0, window_bounds = array<i64: 64, 384>}, {transform_indices = @transform_1, window_bounds = array<i64: 384, 256>}, {transform_indices = @transform_2, window_bounds = array<i64: 1, 256>}, {transform_indices = @transform_3, window_bounds = array<i64: 64, 256>}]} {
    %c0 = arith.constant 0 : index
    %c0_0 = arith.constant 0 : index
    %0 = vector.load %arg2[%c0, %c0_0] : memref<64x384xbf16, #tpu.memory_space<vmem>>, vector<64x384xbf16>
    %c0_1 = arith.constant 0 : index
    %c0_2 = arith.constant 0 : index
    %1 = vector.load %arg3[%c0_1, %c0_2] : memref<384x256xbf16, #tpu.memory_space<vmem>>, vector<384x256xbf16>
    %cst = arith.constant dense<0.000000e+00> : vector<64x256xf32>
    %2 = tpu.matmul %0, %1, %cst {dimension_numbers = #tpu.dot_dimension_numbers<[1], [0], [0], [1], [0, 0, 1, 1], [], []>} : vector<64x384xbf16>, vector<384x256xbf16>, vector<64x256xf32> -> vector<64x256xf32>
    %c0_3 = arith.constant 0 : index
    %c0_4 = arith.constant 0 : index
    %3 = vector.load %arg4[%c0_3, %c0_4] : memref<1x256xf32, #tpu.memory_space<vmem>>, vector<1x256xf32>
    %4 = vector.broadcast %3 : vector<1x256xf32> to vector<64x256xf32>
    %5 = arith.addf %2, %4 : vector<64x256xf32>
    %c0_5 = arith.constant 0 : index
    %c0_6 = arith.constant 0 : index
    %6 = vector.load %arg5[%c0_5, %c0_6] : memref<64x256xf32, #tpu.memory_space<vmem>>, vector<64x256xf32>
    tpu.vector_store %arg5[%c0_5, %c0_6], %5 {strides = array<i32>} : memref<64x256xf32, #tpu.memory_space<vmem>>, vector<64x256xf32>,
    return
  }
  func.func @transform_0(%arg0: i32, %arg1: i32) -> (i32, i32) {
    %c0_i32 = arith.constant 0 : i32
    %c0_i32_0 = arith.constant 0 : i32
    return %arg0, %c0_i32 : i32, i32
  }
  func.func @transform_1(%arg0: i32, %arg1: i32) -> (i32, i32) {
    %c0_i32 = arith.constant 0 : i32
    %c0_i32_0 = arith.constant 0 : i32
    return %c0_i32, %arg1 : i32, i32
  }
  func.func @transform_2(%arg0: i32, %arg1: i32) -> (i32, i32) {
    %c0_i32 = arith.constant 0 : i32
    %c0_i32_0 = arith.constant 0 : i32
    return %c0_i32, %arg1 : i32, i32
  }
  func.func @transform_3(%arg0: i32, %arg1: i32) -> (i32, i32) {
    %c0_i32 = arith.constant 0 : i32
    return %arg0, %arg1 : i32, i32
  }
}

</mosaic_0001>

<llo_original>
// kernel: tpu_custom_call.1
$region0: #{tpu_custom_call.1}
  #allocation0 [shape = 'u32[]', space=smem, size = 0x4, offset = 0x4, fixed_abs, tag = 'smem constant byte address 0x4 - core index']
  #allocation1 [shape = 'u32[144,128]{1,0:T(1,128)}', space=vmem, size = 0x12000, scoped, tag = 'internal scratch']
  %s0 = inlined_call_operand.hbm [shape: bf16[64,384], index: 0, kind: input, shape index: {}]
  %s1 = inlined_call_operand.hbm [shape: bf16[384,512], index: 1, kind: input, shape index: {}]
  %s2 = inlined_call_operand.hbm [shape: f32[1,512], index: 2, kind: input, shape index: {}]
  %s3 = inlined_call_operand.hbm [shape: f32[64,512], index: 3, kind: output, shape index: {}]
  %s4 = sld [smem:[#allocation0]]
  $region57: #{tpu_custom_call.1} parent=0
    _
  %s6 = ssub.s32 1, %s4
  %s7 = scalar_select 0, %s6, %s4
  $region1: #{tpu_custom_call.1} parent=0
    #allocation2 [shape = 'u8[49152]{0}', space=vmem, size = 0xc000, scoped, tag = 'input window, operand 0, single buffered']
    #allocation3 [shape = 's32[2]{0}', space=sflag, size = 0x8, scoped, tag = 'scoped memory for tpu_custom_call.1']
    #allocation4 [shape = 's32[2]{0}', space=sflag, size = 0x8, scoped, tag = 'scoped memory for tpu_custom_call.1']
    #allocation5 [shape = 'u8[393216]{0}', space=vmem, size = 0x60000, scoped, tag = 'input window, operand 1']
    #allocation6 [shape = 's32[2]{0}', space=sflag, size = 0x8, scoped, tag = 'scoped memory for tpu_custom_call.1']
    #allocation7 [shape = 'u8[2048]{0}', space=vmem, size = 0x800, scoped, tag = 'input window, operand 2']
    #allocation8 [shape = 'u8[131072]{0}', space=vmem, size = 0x20000, scoped, tag = 'output window, operand 0']
    %8 = vsyncpa [#allocation3], 0
    %9 = vsyncpa [#allocation6], 0
    %s10 = scalar_lea.sflag [#allocation6], 1
    %11 = vsyncpa %s10, 0
    %12 = vsyncpa [#allocation4], 0
    %s13 = scalar_lea.sflag [#allocation4], 1
    %14 = vsyncpa %s13, 0
    loop: start=0, step=1, limit=4
    $region2: #{tpu_custom_call.1} parent=1 // loop_pre_header
      _
    $region3: #{tpu_custom_call.1} parent=1 // loop_header
      %s16 = sphi 0, %s20
      %p17 = scmp.ge.s32.totalorder %s16, 4
      %s23 = sphi 0, %s35
      %s24 = sphi 0, %s31
      %s25 = sphi 0, %s23
      %s26 = sphi 0, %s24
      %s27 = sphi 0, %s25
      %s28 = sphi 0, %s26
      %s38 = sphi 0, %s40
      %s41 = sphi 0, %s38
      %s42 = sphi 0, %s41
      %s58 = sphi 0, %s42
      %s64 = sphi 0, %s66
      %s67 = sphi 0, %s64
      %s68 = sphi 0, %s67
      %s84 = sphi 0, %s68
      %s90 = sphi 0, %s92
      %s93 = sphi 0, %s90
      %s94 = sphi 0, %s93
      %s110 = sphi 0, %s94
      %s118 = sphi 0, %s120
      %s121 = sphi 0, %s118
      %s122 = sphi 0, %s121
      %s138 = sphi 0, %s122
    $region4: #{tpu_custom_call.1} parent=1 // loop_header_branch
      %19 = sbr.rel (%p17) target = $region8
    $region5: #{tpu_custom_call.1} parent=1 // loop_body
      %s21 = ssub.s32 %s16, 1
      %s22 = ssub.s32 %s16, 2
      %s29 = sadd.s32 1, %s24
      %p30 = scmp.ge.s32.totalorder %s29, 2
      %s31 = scalar_select %p30, 0, %s29
      %s32 = sadd.s32 1, %s23
      %s33 = scalar_select %p30, %s32, %s23
      %p34 = scmp.ge.s32.totalorder %s33, 1
      %s35 = scalar_select %p34, 0, %s33
      %s36 = ssub.s32 %s23, %s35
      %p37 = scmp.eq.s32.totalorder %s36, 0
      %s39 = sadd.s32 %s38, 1
      %s40 = scalar_select %p37, %s38, %s39
      %p43 = pneg %p37
      %p44 = scmp.eq.s32.totalorder %s16, 1
      %p45 = por %p43, %p44
      %p46 = scmp.ne.s32.totalorder %s38, %s41
      %p47 = scmp.eq.s32.totalorder %s16, 0
      %p48 = por %p46, %p47
      %p49 = scmp.ne.s32.totalorder %s38, %s41
      %p50 = scmp.eq.s32.totalorder %s21, 1
      %p51 = por %p49, %p50
      %p52 = scmp.ne.s32.totalorder %s41, %s42
      %p53 = scmp.eq.s32.totalorder %s21, 0
      %p54 = por %p52, %p53
      %p55 = scmp.ne.s32.totalorder %s41, %s42
      %p56 = scmp.eq.s32.totalorder %s22, 1
      %p57 = por %p55, %p56
      %p59 = scmp.ne.s32.totalorder %s42, %s58
      %p60 = scmp.eq.s32.totalorder %s22, 0
      %p61 = por %p59, %p60
      %s62 = ssub.s32 %s24, %s31
      %p63 = scmp.eq.s32.totalorder %s62, 0
      %s65 = sadd.s32 %s64, 1
      %s66 = scalar_select %p63, %s64, %s65
      %p69 = pneg %p63
      %p70 = scmp.eq.s32.totalorder %s16, 1
      %p71 = por %p69, %p70
      %p72 = scmp.ne.s32.totalorder %s64, %s67
      %p73 = scmp.eq.s32.totalorder %s16, 0
      %p74 = por %p72, %p73
      %p75 = scmp.ne.s32.totalorder %s64, %s67
      %p76 = scmp.eq.s32.totalorder %s21, 1
      %p77 = por %p75, %p76
      %p78 = scmp.ne.s32.totalorder %s67, %s68
      %p79 = scmp.eq.s32.totalorder %s21, 0
      %p80 = por %p78, %p79
      %p81 = scmp.ne.s32.totalorder %s67, %s68
      %p82 = scmp.eq.s32.totalorder %s22, 1
      %p83 = por %p81, %p82
      %p85 = scmp.ne.s32.totalorder %s68, %s84
      %p86 = scmp.eq.s32.totalorder %s22, 0
      %p87 = por %p85, %p86
      %s88 = ssub.s32 %s24, %s31
      %p89 = scmp.eq.s32.totalorder %s88, 0
      %s91 = sadd.s32 %s90, 1
      %s92 = scalar_select %p89, %s90, %s91
      %p95 = pneg %p89
      %p96 = scmp.eq.s32.totalorder %s16, 1
      %p97 = por %p95, %p96
      %p98 = scmp.ne.s32.totalorder %s90, %s93
      %p99 = scmp.eq.s32.totalorder %s16, 0
      %p100 = por %p98, %p99
      %p101 = scmp.ne.s32.totalorder %s90, %s93
      %p102 = scmp.eq.s32.totalorder %s21, 1
      %p103 = por %p101, %p102
      %p104 = scmp.ne.s32.totalorder %s93, %s94
      %p105 = scmp.eq.s32.totalorder %s21, 0
      %p106 = por %p104, %p105
      %p107 = scmp.ne.s32.totalorder %s93, %s94
      %p108 = scmp.eq.s32.totalorder %s22, 1
      %p109 = por %p107, %p108
      %p111 = scmp.ne.s32.totalorder %s94, %s110
      %p112 = scmp.eq.s32.totalorder %s22, 0
      %p113 = por %p111, %p112
      %s114 = ssub.s32 %s23, %s35
      %s115 = ssub.s32 %s24, %s31
      %s116 = sor.u32 %s114, %s115
      %p117 = scmp.eq.s32.totalorder %s116, 0
      %s119 = sadd.s32 %s118, 1
      %s120 = scalar_select %p117, %s118, %s119
      %p123 = pneg %p117
      %p124 = scmp.eq.s32.totalorder %s16, 1
      %p125 = por %p123, %p124
      %p126 = scmp.ne.s32.totalorder %s118, %s121
      %p127 = scmp.eq.s32.totalorder %s16, 0
      %p128 = por %p126, %p127
      %p129 = scmp.ne.s32.totalorder %s118, %s121
      %p130 = scmp.eq.s32.totalorder %s21, 1
      %p131 = por %p129, %p130
      %p132 = scmp.ne.s32.totalorder %s121, %s122
      %p133 = scmp.eq.s32.totalorder %s21, 0
      %p134 = por %p132, %p133
      %p135 = scmp.ne.s32.totalorder %s121, %s122
      %p136 = scmp.eq.s32.totalorder %s22, 1
      %p137 = por %p135, %p136
      %p139 = scmp.ne.s32.totalorder %s122, %s138
      %p140 = scmp.eq.s32.totalorder %s22, 0
      %p141 = por %p139, %p140
      %p142 = scmp.le.s32.totalorder 1, %s16
      %p143 = scmp.lt.s32.totalorder %s16, 3
      %p144 = pnand %p142, %p143
      %p145 = pneg %p144
      // Predicated region
      $region9: #{tpu_custom_call.1} parent=5 // pred_check
        _
      $region10: #{tpu_custom_call.1} parent=5 // pred_check_branch
        %147 = sbr.rel (%p144) target = $region12
      $region11: #{tpu_custom_call.1} parent=5 // pred_region
        %s148 = ssub.s32 %s16, 1
        // Predicated region
        $region13: #{tpu_custom_call.1} parent=11 // pred_check
          %p149 = pneg %p54
        $region14: #{tpu_custom_call.1} parent=11 // pred_check_branch
          %151 = sbr.rel (%p149) target = $region16
        $region15: #{tpu_custom_call.1} parent=11 // pred_region
          %s152 = smul.u32 8, %s25
          %s154 = ssub.s32 1536, 1536
          %155 = vsyncadd [#allocation3], %s154
          %s156 = smul.addr %s152, 3
          %s157 = smul.addr %s156, 64
          %s158 = scalar_lea.hbm %s0, %s157
          %s159 = sshll.u32 [#allocation2], 4
          %s160 = int_to_ptr.vmem [resolvable:$true] %s159
          %165 = dma.hbm_to_vmem [thread:$0]  %s158, 1536, %s160, [#allocation3], 192, 192, 12
        $region16: #{tpu_custom_call.1} parent=11 // pred_fallthru
          _
      $region12: #{tpu_custom_call.1} parent=5 // pred_fallthru
        _
      %p166 = scmp.lt.s32.totalorder %s16, 2
      // Predicated region
      $region17: #{tpu_custom_call.1} parent=5 // pred_check
        %p167 = pneg %p166
      $region18: #{tpu_custom_call.1} parent=5 // pred_check_branch
        %169 = sbr.rel (%p167) target = $region20
      $region19: #{tpu_custom_call.1} parent=5 // pred_region
        // Predicated region
        $region21: #{tpu_custom_call.1} parent=19 // pred_check
          %p170 = pneg %p74
        $region22: #{tpu_custom_call.1} parent=19 // pred_check_branch
          %172 = sbr.rel (%p170) target = $region24
        $region23: #{tpu_custom_call.1} parent=19 // pred_region
          %s173 = sand.u32 %s16, 1
          %s174 = scalar_lea.sflag [#allocation6], %s173
          %s175 = sand.u32 %s64, 1
          %s176 = smul.addr %s175, 384
          %s177 = scalar_lea.vmem [#allocation5], %s176
          %s178 = smul.u32 2, %s24
          %s180 = ssub.s32 6144, 6144
          %181 = vsyncadd %s174, %s180
          %s182 = smul.addr %s178, 64
          %s183 = scalar_lea.hbm %s1, %s182
          %s184 = sshll.u32 %s177, 4
          %s185 = int_to_ptr.vmem [resolvable:$true] %s184
          %190 = dma.hbm_to_vmem [thread:$0]  %s183, 6144, %s185, %s174, 256, 128, 8
        $region24: #{tpu_custom_call.1} parent=19 // pred_fallthru
          _
        // Predicated region
        $region25: #{tpu_custom_call.1} parent=19 // pred_check
          %p191 = pneg %p100
        $region26: #{tpu_custom_call.1} parent=19 // pred_check_branch
          %193 = sbr.rel (%p191) target = $region28
        $region27: #{tpu_custom_call.1} parent=19 // pred_region
          %s194 = sand.u32 %s16, 1
          %s195 = scalar_lea.sflag [#allocation6], %s194
          %s196 = sand.u32 %s90, 1
          %s197 = smul.addr %s196, 2
          %s198 = scalar_lea.vmem [#allocation7], %s197
          %s199 = smul.u32 2, %s24
          %s201 = ssub.s32 32, 32
          %202 = vsyncadd %s195, %s201
          %s203 = smul.addr %s199, 16
          %s204 = scalar_lea.hbm %s2, %s203
          %s206 = sshll.u32 %s198, 4
          %s207 = int_to_ptr.vmem [resolvable:$true] %s206
          %209 = dma.hbm_to_vmem [thread:$0]  %s204, 32, %s207, %s195
        $region28: #{tpu_custom_call.1} parent=19 // pred_fallthru
          _
      $region20: #{tpu_custom_call.1} parent=5 // pred_fallthru
        _
      %p210 = scmp.le.s32.totalorder 1, %s16
      %p211 = scmp.lt.s32.totalorder %s16, 3
      %p212 = pnand %p210, %p211
      %p213 = pneg %p212
      // Predicated region
      $region29: #{tpu_custom_call.1} parent=5 // pred_check
        _
      $region30: #{tpu_custom_call.1} parent=5 // pred_check_branch
        %215 = sbr.rel (%p212) target = $region32
      $region31: #{tpu_custom_call.1} parent=5 // pred_region
        %s216 = ssub.s32 %s16, 1
        // Predicated region
        $region33: #{tpu_custom_call.1} parent=31 // pred_check
          %p217 = pneg %p54
        $region34: #{tpu_custom_call.1} parent=31 // pred_check_branch
          %219 = sbr.rel (%p217) target = $region36
        $region35: #{tpu_custom_call.1} parent=31 // pred_region
          %220 = dma.done [#allocation3], 1536
        $region36: #{tpu_custom_call.1} parent=31 // pred_fallthru
          _
        %s221 = sand.u32 %s21, 1
        %s222 = scalar_lea.sflag [#allocation6], %s221
        %s223 = sand.u32 %s67, 1
        %s224 = smul.addr %s223, 384
        %s225 = scalar_lea.vmem [#allocation5], %s224
        // Predicated region
        $region37: #{tpu_custom_call.1} parent=31 // pred_check
          %p226 = pneg %p80
        $region38: #{tpu_custom_call.1} parent=31 // pred_check_branch
          %228 = sbr.rel (%p226) target = $region40
        $region39: #{tpu_custom_call.1} parent=31 // pred_region
          %229 = dma.done %s222, 6144
        $region40: #{tpu_custom_call.1} parent=31 // pred_fallthru
          _
        %s230 = sand.u32 %s21, 1
        %s231 = scalar_lea.sflag [#allocation6], %s230
        %s232 = sand.u32 %s93, 1
        %s233 = smul.addr %s232, 2
        %s234 = scalar_lea.vmem [#allocation7], %s233
        // Predicated region
        $region41: #{tpu_custom_call.1} parent=31 // pred_check
          %p235 = pneg %p106
        $region42: #{tpu_custom_call.1} parent=31 // pred_check_branch
          %237 = sbr.rel (%p235) target = $region44
        $region43: #{tpu_custom_call.1} parent=31 // pred_region
          %238 = dma.done %s231, 32
        $region44: #{tpu_custom_call.1} parent=31 // pred_fallthru
          _
        %p239 = pneg %p54
        %p240 = pneg %p51
        %s241 = sand.u32 %s21, 1
        %s242 = scalar_lea.sflag [#allocation6], %s241
        %s243 = sand.u32 %s67, 1
        %s244 = smul.addr %s243, 384
        %s245 = scalar_lea.vmem [#allocation5], %s244
        %p246 = pneg %p80
        %p247 = pneg %p77
        %s248 = sand.u32 %s21, 1
        %s249 = scalar_lea.sflag [#allocation6], %s248
        %s250 = sand.u32 %s93, 1
        %s251 = smul.addr %s250, 2
        %s252 = scalar_lea.vmem [#allocation7], %s251
        %p253 = pneg %p106
        %p254 = pneg %p103
        %p255 = pneg %p134
        %p256 = pneg %p131
        %s257 = sand.u32 %s121, 1
        %s258 = scalar_lea.sflag [#allocation4], %s257
        %s259 = sand.u32 %s121, 1
        %s260 = smul.addr %s259, 128
        %s261 = scalar_lea.vmem [#allocation8], %s260
        %s262 = smul.u32 8, %s25
        %s263 = smul.u32 2, %s26
        %s264 = smul.u32 2, %s26
        %s265 = smul.u32 8, %s25
        %s266 = smul.u32 2, %s26
        %v268 = vld [vmem:[#allocation2] sm:$0xff]
        %v269 = vld [vmem:[#allocation2 + $0x8] sm:$0xf]
        %v270 = vld [vmem:[#allocation2 + $0xc] sm:$0xff]
        %v271 = vld [vmem:[#allocation2 + $0x14] sm:$0xf]
        %v272 = vld [vmem:[#allocation2 + $0x18] sm:$0xff]
        %v273 = vld [vmem:[#allocation2 + $0x20] sm:$0xf]
        %v274 = vld [vmem:[#allocation2 + $0x24] sm:$0xff]
        %v275 = vld [vmem:[#allocation2 + $0x2c] sm:$0xf]
        %v276 = vld [vmem:[#allocation2 + $0x30] sm:$0xff]
        %v277 = vld [vmem:[#allocation2 + $0x38] sm:$0xf]
        %v278 = vld [vmem:[#allocation2 + $0x3c] sm:$0xff]
        %v279 = vld [vmem:[#allocation2 + $0x44] sm:$0xf]
        %v280 = vld [vmem:[#allocation2 + $0x48] sm:$0xff]
        %v281 = vld [vmem:[#allocation2 + $0x50] sm:$0xf]
        %v282 = vld [vmem:[#allocation2 + $0x54] sm:$0xff]
        %v283 = vld [vmem:[#allocation2 + $0x5c] sm:$0xf]
        %v284 = vld [vmem:[%s225] sm:$0xff]
        %v285 = vld [vmem:[%s225 + $0x8] sm:$0xff]
        %v286 = vld [vmem:[%s225 + $0x10] sm:$0xff]
        %v287 = vld [vmem:[%s225 + $0x18] sm:$0xff]
        %v288 = vld [vmem:[%s225 + $0x20] sm:$0xff]
        %v289 = vld [vmem:[%s225 + $0x28] sm:$0xff]
        %v290 = vld [vmem:[%s225 + $0x30] sm:$0xff]
        %v291 = vld [vmem:[%s225 + $0x38] sm:$0xff]
        %v292 = vld [vmem:[%s225 + $0x40] sm:$0xff]
        %v293 = vld [vmem:[%s225 + $0x48] sm:$0xff]
        %v294 = vld [vmem:[%s225 + $0x50] sm:$0xff]
        %v295 = vld [vmem:[%s225 + $0x58] sm:$0xff]
        %v296 = vld [vmem:[%s225 + $0x60] sm:$0xff]
        %v297 = vld [vmem:[%s225 + $0x68] sm:$0xff]
        %v298 = vld [vmem:[%s225 + $0x70] sm:$0xff]
        %v299 = vld [vmem:[%s225 + $0x78] sm:$0xff]
        %v300 = vld [vmem:[%s225 + $0x80] sm:$0xff]
        %v301 = vld [vmem:[%s225 + $0x88] sm:$0xff]
        %v302 = vld [vmem:[%s225 + $0x90] sm:$0xff]
        %v303 = vld [vmem:[%s225 + $0x98] sm:$0xff]
        %v304 = vld [vmem:[%s225 + $0xa0] sm:$0xff]
        %v305 = vld [vmem:[%s225 + $0xa8] sm:$0xff]
        %v306 = vld [vmem:[%s225 + $0xb0] sm:$0xff]
        %v307 = vld [vmem:[%s225 + $0xb8] sm:$0xff]
        %v308 = vld [vmem:[%s225 + $0xc0] sm:$0xff]
        %v309 = vld [vmem:[%s225 + $0xc8] sm:$0xff]
        %v310 = vld [vmem:[%s225 + $0xd0] sm:$0xff]
        %v311 = vld [vmem:[%s225 + $0xd8] sm:$0xff]
        %v312 = vld [vmem:[%s225 + $0xe0] sm:$0xff]
        %v313 = vld [vmem:[%s225 + $0xe8] sm:$0xff]
        %v314 = vld [vmem:[%s225 + $0xf0] sm:$0xff]
        %v315 = vld [vmem:[%s225 + $0xf8] sm:$0xff]
        %v316 = vld [vmem:[%s225 + $0x100] sm:$0xff]
        %v317 = vld [vmem:[%s225 + $0x108] sm:$0xff]
        %v318 = vld [vmem:[%s225 + $0x110] sm:$0xff]
        %v319 = vld [vmem:[%s225 + $0x118] sm:$0xff]
        %v320 = vld [vmem:[%s225 + $0x120] sm:$0xff]
        %v321 = vld [vmem:[%s225 + $0x128] sm:$0xff]
        %v322 = vld [vmem:[%s225 + $0x130] sm:$0xff]
        %v323 = vld [vmem:[%s225 + $0x138] sm:$0xff]
        %v324 = vld [vmem:[%s225 + $0x140] sm:$0xff]
        %v325 = vld [vmem:[%s225 + $0x148] sm:$0xff]
        %v326 = vld [vmem:[%s225 + $0x150] sm:$0xff]
        %v327 = vld [vmem:[%s225 + $0x158] sm:$0xff]
        %v328 = vld [vmem:[%s225 + $0x160] sm:$0xff]
        %v329 = vld [vmem:[%s225 + $0x168] sm:$0xff]
        %v330 = vld [vmem:[%s225 + $0x170] sm:$0xff]
        %v331 = vld [vmem:[%s225 + $0x178] sm:$0xff]
        %v332 = vld [vmem:[%s234] sm:$0x3]
        %v334 = vlaneseq
        %v335 = vshrl.u32 %v334, 7
        %v336 = vsub.s32 0, %v335
        %v337 = vrot.slane %v332, %v336
        %v338 = vlaneseq
        %v339 = vshrl.u32 %v338, 7
        %v340 = vsub.s32 1, %v339
        %v341 = vrot.slane %v332, %v340
        %v360 = vunpack.c.l.b16 %v268
        %v361 = vunpack.c.h.b16 %v268
        %v362 = vunpack.c.l.b16 %v269
        %v363 = vunpack.c.l.b16 %v270
        %v364 = vunpack.c.h.b16 %v270
        %v365 = vunpack.c.l.b16 %v271
        %v366 = vunpack.c.l.b16 %v272
        %v367 = vunpack.c.h.b16 %v272
        %v368 = vunpack.c.l.b16 %v273
        %v369 = vunpack.c.l.b16 %v274
        %v370 = vunpack.c.h.b16 %v274
        %v371 = vunpack.c.l.b16 %v275
        %v372 = vunpack.c.l.b16 %v276
        %v373 = vunpack.c.h.b16 %v276
        %v374 = vunpack.c.l.b16 %v277
        %v375 = vunpack.c.l.b16 %v278
        %v376 = vunpack.c.h.b16 %v278
        %v377 = vunpack.c.l.b16 %v279
        %v378 = vunpack.c.l.b16 %v280
        %v379 = vunpack.c.h.b16 %v280
        %v380 = vunpack.c.l.b16 %v281
        %v381 = vunpack.c.l.b16 %v282
        %v382 = vunpack.c.h.b16 %v282
        %v383 = vunpack.c.l.b16 %v283
        %v384 = vpack.c.b16 %v363, %v360
        %v385 = vpack.c.b16 %v364, %v361
        %v386 = vpack.c.b16 %v365, %v362
        %v387 = vpack.c.b16 %v369, %v366
        %v388 = vpack.c.b16 %v370, %v367
        %v389 = vpack.c.b16 %v371, %v368
        %v390 = vpack.c.b16 %v375, %v372
        %v391 = vpack.c.b16 %v376, %v373
        %v392 = vpack.c.b16 %v377, %v374
        %v393 = vpack.c.b16 %v381, %v378
        %v394 = vpack.c.b16 %v382, %v379
        %v395 = vpack.c.b16 %v383, %v380
        %v456 = vunpack.c.l.b16 %v284
        %v457 = vunpack.c.h.b16 %v284
        %v458 = vunpack.c.l.b16 %v285
        %v459 = vunpack.c.h.b16 %v285
        %v460 = vunpack.c.l.b16 %v286
        %v461 = vunpack.c.h.b16 %v286
        %v462 = vunpack.c.l.b16 %v287
        %v463 = vunpack.c.h.b16 %v287
        %v464 = vunpack.c.l.b16 %v288
        %v465 = vunpack.c.h.b16 %v288
        %v466 = vunpack.c.l.b16 %v289
        %v467 = vunpack.c.h.b16 %v289
        %v468 = vunpack.c.l.b16 %v290
        %v469 = vunpack.c.h.b16 %v290
        %v470 = vunpack.c.l.b16 %v291
        %v471 = vunpack.c.h.b16 %v291
        %v472 = vunpack.c.l.b16 %v292
        %v473 = vunpack.c.h.b16 %v292
        %v474 = vunpack.c.l.b16 %v293
        %v475 = vunpack.c.h.b16 %v293
        %v476 = vunpack.c.l.b16 %v294
        %v477 = vunpack.c.h.b16 %v294
        %v478 = vunpack.c.l.b16 %v295
        %v479 = vunpack.c.h.b16 %v295
        %v480 = vunpack.c.l.b16 %v296
        %v481 = vunpack.c.h.b16 %v296
        %v482 = vunpack.c.l.b16 %v297
        %v483 = vunpack.c.h.b16 %v297
        %v484 = vunpack.c.l.b16 %v298
        %v485 = vunpack.c.h.b16 %v298
        %v486 = vunpack.c.l.b16 %v299
        %v487 = vunpack.c.h.b16 %v299
        %v488 = vunpack.c.l.b16 %v300
        %v489 = vunpack.c.h.b16 %v300
        %v490 = vunpack.c.l.b16 %v301
        %v491 = vunpack.c.h.b16 %v301
        %v492 = vunpack.c.l.b16 %v302
        %v493 = vunpack.c.h.b16 %v302
        %v494 = vunpack.c.l.b16 %v303
        %v495 = vunpack.c.h.b16 %v303
        %v496 = vunpack.c.l.b16 %v304
        %v497 = vunpack.c.h.b16 %v304
        %v498 = vunpack.c.l.b16 %v305
        %v499 = vunpack.c.h.b16 %v305
        %v500 = vunpack.c.l.b16 %v306
        %v501 = vunpack.c.h.b16 %v306
        %v502 = vunpack.c.l.b16 %v307
        %v503 = vunpack.c.h.b16 %v307
        %v504 = vunpack.c.l.b16 %v308
        %v505 = vunpack.c.h.b16 %v308
        %v506 = vunpack.c.l.b16 %v309
        %v507 = vunpack.c.h.b16 %v309
        %v508 = vunpack.c.l.b16 %v310
        %v509 = vunpack.c.h.b16 %v310
        %v510 = vunpack.c.l.b16 %v311
        %v511 = vunpack.c.h.b16 %v311
        %v512 = vunpack.c.l.b16 %v312
        %v513 = vunpack.c.h.b16 %v312
        %v514 = vunpack.c.l.b16 %v313
        %v515 = vunpack.c.h.b16 %v313
        %v516 = vunpack.c.l.b16 %v314
        %v517 = vunpack.c.h.b16 %v314
        %v518 = vunpack.c.l.b16 %v315
        %v519 = vunpack.c.h.b16 %v315
        %v520 = vunpack.c.l.b16 %v316
        %v521 = vunpack.c.h.b16 %v316
        %v522 = vunpack.c.l.b16 %v317
        %v523 = vunpack.c.h.b16 %v317
        %v524 = vunpack.c.l.b16 %v318
        %v525 = vunpack.c.h.b16 %v318
        %v526 = vunpack.c.l.b16 %v319
        %v527 = vunpack.c.h.b16 %v319
        %v528 = vunpack.c.l.b16 %v320
        %v529 = vunpack.c.h.b16 %v320
        %v530 = vunpack.c.l.b16 %v321
        %v531 = vunpack.c.h.b16 %v321
        %v532 = vunpack.c.l.b16 %v322
        %v533 = vunpack.c.h.b16 %v322
        %v534 = vunpack.c.l.b16 %v323
        %v535 = vunpack.c.h.b16 %v323
        %v536 = vunpack.c.l.b16 %v324
        %v537 = vunpack.c.h.b16 %v324
        %v538 = vunpack.c.l.b16 %v325
        %v539 = vunpack.c.h.b16 %v325
        %v540 = vunpack.c.l.b16 %v326
        %v541 = vunpack.c.h.b16 %v326
        %v542 = vunpack.c.l.b16 %v327
        %v543 = vunpack.c.h.b16 %v327
        %v544 = vunpack.c.l.b16 %v328
        %v545 = vunpack.c.h.b16 %v328
        %v546 = vunpack.c.l.b16 %v329
        %v547 = vunpack.c.h.b16 %v329
        %v548 = vunpack.c.l.b16 %v330
        %v549 = vunpack.c.h.b16 %v330
        %v550 = vunpack.c.l.b16 %v331
        %v551 = vunpack.c.h.b16 %v331
        %v552 = vpack.c.b16 %v458, %v456
        %v553 = vpack.c.b16 %v459, %v457
        %v554 = vpack.c.b16 %v462, %v460
        %v555 = vpack.c.b16 %v463, %v461
        %v556 = vpack.c.b16 %v466, %v464
        %v557 = vpack.c.b16 %v467, %v465
        %v558 = vpack.c.b16 %v470, %v468
        %v559 = vpack.c.b16 %v471, %v469
        %v560 = vpack.c.b16 %v474, %v472
        %v561 = vpack.c.b16 %v475, %v473
        %v562 = vpack.c.b16 %v478, %v476
        %v563 = vpack.c.b16 %v479, %v477
        %v564 = vpack.c.b16 %v482, %v480
        %v565 = vpack.c.b16 %v483, %v481
        %v566 = vpack.c.b16 %v486, %v484
        %v567 = vpack.c.b16 %v487, %v485
        %v568 = vpack.c.b16 %v490, %v488
        %v569 = vpack.c.b16 %v491, %v489
        %v570 = vpack.c.b16 %v494, %v492
        %v571 = vpack.c.b16 %v495, %v493
        %v572 = vpack.c.b16 %v498, %v496
        %v573 = vpack.c.b16 %v499, %v497
        %v574 = vpack.c.b16 %v502, %v500
        %v575 = vpack.c.b16 %v503, %v501
        %v576 = vpack.c.b16 %v506, %v504
        %v577 = vpack.c.b16 %v507, %v505
        %v578 = vpack.c.b16 %v510, %v508
        %v579 = vpack.c.b16 %v511, %v509
        %v580 = vpack.c.b16 %v514, %v512
        %v581 = vpack.c.b16 %v515, %v513
        %v582 = vpack.c.b16 %v518, %v516
        %v583 = vpack.c.b16 %v519, %v517
        %v584 = vpack.c.b16 %v522, %v520
        %v585 = vpack.c.b16 %v523, %v521
        %v586 = vpack.c.b16 %v526, %v524
        %v587 = vpack.c.b16 %v527, %v525
        %v588 = vpack.c.b16 %v530, %v528
        %v589 = vpack.c.b16 %v531, %v529
        %v590 = vpack.c.b16 %v534, %v532
        %v591 = vpack.c.b16 %v535, %v533
        %v592 = vpack.c.b16 %v538, %v536
        %v593 = vpack.c.b16 %v539, %v537
        %v594 = vpack.c.b16 %v542, %v540
        %v595 = vpack.c.b16 %v543, %v541
        %v596 = vpack.c.b16 %v546, %v544
        %v597 = vpack.c.b16 %v547, %v545
        %v598 = vpack.c.b16 %v550, %v548
        %v599 = vpack.c.b16 %v551, %v549
        %648 = vmatprep.subr.bf16.mxu0 %v567
        %649 = vmatpush1.bf16.msra.mxu0 %v566
        %650 = vmatprep.subr.bf16.mxu0 %v565
        %651 = vmatpush1.bf16.msra.mxu0 %v564
        %652 = vmatprep.subr.bf16.mxu0 %v563
        %653 = vmatpush1.bf16.msra.mxu0 %v562
        %654 = vmatprep.subr.bf16.mxu0 %v561
        %655 = vmatpush1.bf16.msra.mxu0 %v560
        %656 = vmatprep.subr.bf16.mxu0 %v559
        %657 = vmatpush1.bf16.msra.mxu0 %v558
        %658 = vmatprep.subr.bf16.mxu0 %v557
        %659 = vmatpush1.bf16.msra.mxu0 %v556
        %660 = vmatprep.subr.bf16.mxu0 %v555
        %661 = vmatpush1.bf16.msra.mxu0 %v554
        %662 = vmatprep.subr.bf16.mxu0 %v553
        %663 = vmatpush1.bf16.msra.mxu0 %v552
        %664 = vmatprep.subr.bf16.mxu0 %v583
        %665 = vmatpush2.bf16.msra.mxu0 %v582
        %666 = vmatprep.subr.bf16.mxu0 %v581
        %667 = vmatpush2.bf16.msra.mxu0 %v580
        %668 = vmatprep.subr.bf16.mxu0 %v579
        %669 = vmatpush2.bf16.msra.mxu0 %v578
        %670 = vmatprep.subr.bf16.mxu0 %v577
        %671 = vmatpush2.bf16.msra.mxu0 %v576
        %672 = vmatprep.subr.bf16.mxu0 %v575
        %673 = vmatpush2.bf16.msra.mxu0 %v574
        %674 = vmatprep.subr.bf16.mxu0 %v573
        %675 = vmatpush2.bf16.msra.mxu0 %v572
        %676 = vmatprep.subr.bf16.mxu0 %v571
        %677 = vmatpush2.bf16.msra.mxu0 %v570
        %678 = vmatprep.subr.bf16.mxu0 %v569
        %679 = vmatpush2.bf16.msra.mxu0 %v568
        %680 = vmatprep.mubr.bf16.mxu0 %v385
        %681 = vmatmul.mubr.bf16.gmra.mxu0 %v384
        %v682 = vpop.f32.mrf.mxu0
        %v683 = vadd.f32 %v337, %v682
        %v684 = vpop.f32.mrf.mxu0
        %v685 = vadd.f32 %v341, %v684
        %v686 = vpop.f32.mrf.mxu0
        %v687 = vadd.f32 %v337, %v686
        %v688 = vpop.f32.mrf.mxu0
        %v689 = vadd.f32 %v341, %v688
        %690 = vmatprep.mubr.bf16.mxu0 %v388
        %691 = vmatmul.mubr.bf16.gmra.mxu0 %v387
        %v692 = vpop.f32.mrf.mxu0
        %v693 = vadd.f32 %v337, %v692
        %v694 = vpop.f32.mrf.mxu0
        %v695 = vadd.f32 %v341, %v694
        %v696 = vpop.f32.mrf.mxu0
        %v697 = vadd.f32 %v337, %v696
        %v698 = vpop.f32.mrf.mxu0
        %v699 = vadd.f32 %v341, %v698
        %700 = vmatprep.mubr.bf16.mxu0 %v391
        %701 = vmatmul.mubr.bf16.gmra.mxu0 %v390
        %v702 = vpop.f32.mrf.mxu0
        %v703 = vadd.f32 %v337, %v702
        %v704 = vpop.f32.mrf.mxu0
        %v705 = vadd.f32 %v341, %v704
        %v706 = vpop.f32.mrf.mxu0
        %v707 = vadd.f32 %v337, %v706
        %v708 = vpop.f32.mrf.mxu0
        %v709 = vadd.f32 %v341, %v708
        %710 = vmatprep.mubr.bf16.mxu0 %v394
        %711 = vmatmul.mubr.bf16.gmra.mxu0 %v393
        %v712 = vpop.f32.mrf.mxu0
        %v713 = vadd.f32 %v337, %v712
        %v714 = vpop.f32.mrf.mxu0
        %v715 = vadd.f32 %v341, %v714
        %v716 = vpop.f32.mrf.mxu0
        %v717 = vadd.f32 %v337, %v716
        %v718 = vpop.f32.mrf.mxu0
        %v719 = vadd.f32 %v341, %v718
        %720 = vdwg.mxu0
        %721 = vmatprep.subr.bf16.mxu0 %v599
        %722 = vmatpush1.bf16.msra.mxu0 %v598
        %723 = vmatprep.subr.bf16.mxu0 %v597
        %724 = vmatpush1.bf16.msra.mxu0 %v596
        %725 = vmatprep.subr.bf16.mxu0 %v595
        %726 = vmatpush1.bf16.msra.mxu0 %v594
        %727 = vmatprep.subr.bf16.mxu0 %v593
        %728 = vmatpush1.bf16.msra.mxu0 %v592
        %729 = vmatprep.subr.bf16.mxu0 %v591
        %730 = vmatpush1.bf16.msra.mxu0 %v590
        %731 = vmatprep.subr.bf16.mxu0 %v589
        %732 = vmatpush1.bf16.msra.mxu0 %v588
        %733 = vmatprep.subr.bf16.mxu0 %v587
        %734 = vmatpush1.bf16.msra.mxu0 %v586
        %735 = vmatprep.subr.bf16.mxu0 %v585
        %736 = vmatpush1.bf16.msra.mxu0 %v584
        %737 = vmatprep.subr.bf16.mxu0 0
        %738 = vmatpush2.bf16.msra.mxu0 0
        %739 = vmatprep.subr.bf16.mxu0 0
        %740 = vmatpush2.bf16.msra.mxu0 0
        %741 = vmatprep.subr.bf16.mxu0 0
        %742 = vmatpush2.bf16.msra.mxu0 0
        %743 = vmatprep.subr.bf16.mxu0 0
        %744 = vmatpush2.bf16.msra.mxu0 0
        %745 = vmatprep.subr.bf16.mxu0 0
        %746 = vmatpush2.bf16.msra.mxu0 0
        %747 = vmatprep.subr.bf16.mxu0 0
        %748 = vmatpush2.bf16.msra.mxu0 0
        %749 = vmatprep.subr.bf16.mxu0 0
        %750 = vmatpush2.bf16.msra.mxu0 0
        %751 = vmatprep.subr.bf16.mxu0 0
        %752 = vmatpush2.bf16.msra.mxu0 0
        %753 = vmatprep.mubr.bf16.mxu0 0
        %754 = vmatmul.mubr.bf16.gmra.mxu0 %v386
        %v755 = vpop.f32.mrf.mxu0
        %v756 = vadd.f32 %v683, %v755
        %v757 = vpop.f32.mrf.mxu0
        %v758 = vadd.f32 %v685, %v757
        %v759 = vpop.f32.mrf.mxu0
        %v760 = vadd.f32 %v687, %v759
        %v761 = vpop.f32.mrf.mxu0
        %v762 = vadd.f32 %v689, %v761
        %763 = vmatprep.mubr.bf16.mxu0 0
        %764 = vmatmul.mubr.bf16.gmra.mxu0 %v389
        %v765 = vpop.f32.mrf.mxu0
        %v766 = vadd.f32 %v693, %v765
        %v767 = vpop.f32.mrf.mxu0
        %v768 = vadd.f32 %v695, %v767
        %v769 = vpop.f32.mrf.mxu0
        %v770 = vadd.f32 %v697, %v769
        %v771 = vpop.f32.mrf.mxu0
        %v772 = vadd.f32 %v699, %v771
        %773 = vmatprep.mubr.bf16.mxu0 0
        %774 = vmatmul.mubr.bf16.gmra.mxu0 %v392
        %v775 = vpop.f32.mrf.mxu0
        %v776 = vadd.f32 %v703, %v775
        %v777 = vpop.f32.mrf.mxu0
        %v778 = vadd.f32 %v705, %v777
        %v779 = vpop.f32.mrf.mxu0
        %v780 = vadd.f32 %v707, %v779
        %v781 = vpop.f32.mrf.mxu0
        %v782 = vadd.f32 %v709, %v781
        %783 = vmatprep.mubr.bf16.mxu0 0
        %784 = vmatmul.mubr.bf16.gmra.mxu0 %v395
        %v785 = vpop.f32.mrf.mxu0
        %v786 = vadd.f32 %v713, %v785
        %v787 = vpop.f32.mrf.mxu0
        %v788 = vadd.f32 %v715, %v787
        %v789 = vpop.f32.mrf.mxu0
        %v790 = vadd.f32 %v717, %v789
        %v791 = vpop.f32.mrf.mxu0
        %v792 = vadd.f32 %v719, %v791
        %793 = vdwg.mxu0
        %794 = vst [vmem:[%s261] sm:$0xff] %v756
        %795 = vst [vmem:[%s261 + $0x8] sm:$0xff] %v758
        %796 = vst [vmem:[%s261 + $0x10] sm:$0xff] %v760
        %797 = vst [vmem:[%s261 + $0x18] sm:$0xff] %v762
        %798 = vst [vmem:[%s261 + $0x20] sm:$0xff] %v766
        %799 = vst [vmem:[%s261 + $0x28] sm:$0xff] %v768
        %800 = vst [vmem:[%s261 + $0x30] sm:$0xff] %v770
        %801 = vst [vmem:[%s261 + $0x38] sm:$0xff] %v772
        %802 = vst [vmem:[%s261 + $0x40] sm:$0xff] %v776
        %803 = vst [vmem:[%s261 + $0x48] sm:$0xff] %v778
        %804 = vst [vmem:[%s261 + $0x50] sm:$0xff] %v780
        %805 = vst [vmem:[%s261 + $0x58] sm:$0xff] %v782
        %806 = vst [vmem:[%s261 + $0x60] sm:$0xff] %v786
        %807 = vst [vmem:[%s261 + $0x68] sm:$0xff] %v788
        %808 = vst [vmem:[%s261 + $0x70] sm:$0xff] %v790
        %809 = vst [vmem:[%s261 + $0x78] sm:$0xff] %v792
        %s810 = sand.u32 %s121, 1
        %s811 = scalar_lea.sflag [#allocation4], %s810
        %s812 = sand.u32 %s121, 1
        %s813 = smul.addr %s812, 128
        %s814 = scalar_lea.vmem [#allocation8], %s813
        // Predicated region
        $region45: #{tpu_custom_call.1} parent=31 // pred_check
          %p815 = pneg %p131
        $region46: #{tpu_custom_call.1} parent=31 // pred_check_branch
          %817 = sbr.rel (%p815) target = $region48
        $region47: #{tpu_custom_call.1} parent=31 // pred_region
          %s818 = smul.u32 8, %s25
          %s819 = smul.u32 2, %s26
          %s821 = ssub.s32 2048, 2048
          %822 = vsyncadd %s811, %s821
          %s823 = smul.addr %s818, 4
          %s824 = sadd.s32 %s819, %s823
          %s825 = smul.addr %s824, 128
          %s826 = scalar_lea.hbm %s3, %s825
          %s827 = sshll.u32 %s814, 4
          %s828 = int_to_ptr.vmem [resolvable:$true] %s827
          %833 = dma.vmem_to_hbm [thread:$0]  %s828, 2048, %s826, %s811, 256, 512, 16
        $region48: #{tpu_custom_call.1} parent=31 // pred_fallthru
          _
      $region32: #{tpu_custom_call.1} parent=5 // pred_fallthru
        _
      %p834 = scmp.le.s32.totalorder 2, %s16
      // Predicated region
      $region49: #{tpu_custom_call.1} parent=5 // pred_check
        %p835 = pneg %p834
      $region50: #{tpu_custom_call.1} parent=5 // pred_check_branch
        %837 = sbr.rel (%p835) target = $region52
      $region51: #{tpu_custom_call.1} parent=5 // pred_region
        %s838 = ssub.s32 %s16, 2
        // Predicated region
        $region53: #{tpu_custom_call.1} parent=51 // pred_check
          %p839 = pneg %p137
        $region54: #{tpu_custom_call.1} parent=51 // pred_check_branch
          %841 = sbr.rel (%p839) target = $region56
        $region55: #{tpu_custom_call.1} parent=51 // pred_region
          %s842 = sand.u32 %s122, 1
          %s843 = scalar_lea.sflag [#allocation4], %s842
          %s844 = sand.u32 %s122, 1
          %s845 = smul.addr %s844, 128
          %s846 = scalar_lea.vmem [#allocation8], %s845
          %847 = dma.done %s843, 2048
        $region56: #{tpu_custom_call.1} parent=51 // pred_fallthru
          _
      $region52: #{tpu_custom_call.1} parent=5 // pred_fallthru
        _
    $region6: #{tpu_custom_call.1} parent=1 // loop_footer
      %s20 = sadd.s32 1, %s16
    $region7: #{tpu_custom_call.1} parent=1 // loop_footer_branch
      %15 = sbr.rel target = $region3
    $region8: #{tpu_custom_call.1} parent=1 // loop_exit
      _
    %848 = vsyncpa [#allocation3], 1
    %s849 = scalar_lea.sflag [#allocation3], 1
    %850 = vsyncpa %s849, 1
    %851 = vsyncpa [#allocation6], 1
    %s852 = scalar_lea.sflag [#allocation6], 1
    %853 = vsyncpa %s852, 1
    %854 = vsyncpa [#allocation4], 1
    %s855 = scalar_lea.sflag [#allocation4], 1
    %856 = vsyncpa %s855, 1

</llo_original>
